<compile_context>
chip_gen: v7x
topology: tpu7x:2x2x1
jax: 0.10.0
libtpu: 0.0.40
codegen_flags: <defaults>
</compile_context>

<pallas_src>
import functools

import jax
import jax.numpy as jnp
import numpy as np
from jax.experimental import pallas as pl
from jax.experimental.pallas import tpu as pltpu


def _user_plugin_kernel(base_ref, list_ref, counts_ref, empty_ref, w_ref,
                        b_ref, out_ref, slab_ref, *, base_width, hidden,
                        n_list):
    """Mean-pool list columns + fused projection for one batch tile.

    base_ref:   (Bt, base_width)        [user_embedding | scalar-col embeds]
    list_ref:   (Bt, n_list, L, H)      gathered list-col rows (invalid = 0)
    counts_ref: (Bt, n_list)            #valid items per (uid, list col)
    empty_ref:  (1, H)                  empty_embed parameter
    w_ref:      (base_width + n_list*H, H)   Linear weight, transposed
    b_ref:      (1, H)                  Linear bias
    out_ref:    (Bt, H)
    slab_ref:   (Bt, base_width + n_list*H)  VMEM scratch concat slab
    """
    # 1) user_embedding + scalar columns go straight into the concat slab.
    slab_ref[:, :base_width] = base_ref[...]

    # 2) list-column mean pool.  Mask-free: invalid slots are zero-padded by
    #    the gather glue.  One reciprocal + one fused empty-embed select for
    #    all list columns (no per-column broadcast/select).
    counts = counts_ref[...]                                    # (Bt, C_list)
    sums = jnp.sum(list_ref[...], axis=2)                       # (Bt, C_list, H)
    inv = pl.reciprocal(jnp.maximum(counts, 1.0), approx=False)
    means = sums * inv[:, :, None]
    means = jnp.where(counts[:, :, None] > 0.0, means,
                      empty_ref[...][None, :, :])               # (Bt, C_list, H)
    for c in range(n_list):                                     # static unroll
        lo = base_width + c * hidden
        slab_ref[:, lo:lo + hidden] = means[:, c, :]

    # 3) single K = base_width + n_list*H (=128) contraction on the MXU.
    out_ref[...] = jnp.dot(slab_ref[...], w_ref[...],
                           preferred_element_type=jnp.float32) + b_ref[...]


def user_plugin_forward(base, list_emb, list_counts, empty_embed, w_kernel,
                        bias, *, b_tile=None):
    """Pallas wrapper: batch-tiled grid, weights resident in VMEM."""
    B, base_w = base.shape
    _, n_list, L, H = list_emb.shape
    d_in = base_w + n_list * H
    assert w_kernel.shape == (d_in, H)

    if b_tile is None:
        # At realistic batch sizes pick the largest tile that fits VMEM with
        # double buffering (~512-2048 rows on v5e/v6e; about half on v7x's
        # 64 MiB VMEM).  The test below uses a small tile to exercise the grid.
        b_tile = min(B, 512)
    assert B % b_tile == 0 and b_tile % 8 == 0

    kernel = functools.partial(_user_plugin_kernel, base_width=base_w,
                               hidden=H, n_list=n_list)
    return pl.pallas_call(
        kernel,
        out_shape=jax.ShapeDtypeStruct((B, H), jnp.float32),
        grid_spec=pltpu.PrefetchScalarGridSpec(
            num_scalar_prefetch=0,
            grid=(B // b_tile,),
            in_specs=[
                pl.BlockSpec((b_tile, base_w), lambda i: (i, 0)),
                pl.BlockSpec((b_tile, n_list, L, H), lambda i: (i, 0, 0, 0)),
                pl.BlockSpec((b_tile, n_list), lambda i: (i, 0)),
                pl.BlockSpec((1, H), lambda i: (0, 0)),        # resident
                pl.BlockSpec((d_in, H), lambda i: (0, 0)),     # resident
                pl.BlockSpec((1, H), lambda i: (0, 0)),        # resident
            ],
            out_specs=pl.BlockSpec((b_tile, H), lambda i: (i, 0)),
            scratch_shapes=[pltpu.VMEM((b_tile, d_in), jnp.float32)],
        ),
        compiler_params=pltpu.CompilerParams(
            # batch axis is independent -> megacore sharding on v7x
            dimension_semantics=("parallel",),
            # raised scoped-VMEM limit so realistic b_tile sizes fit on all
            # generations (kept below v7x's 64 MiB physical VMEM).
            vmem_limit_bytes=48 * 1024 * 1024,
        ),
    )(base, list_emb, list_counts, empty_embed, w_kernel, bias)


def reference_forward(gathered, mask, empty_embed, user_embedding, w_full_t,
                      bias):
    """Pure-JAX reference mirroring the PyTorch forward exactly."""
    counts = jnp.sum(mask, axis=-1, keepdims=True)                 # (B, C, 1)
    sums = jnp.sum(gathered * mask[..., None], axis=2)             # (B, C, H)
    mean = jnp.where(counts > 0.0, sums / jnp.maximum(counts, 1.0),
                     empty_embed[None, :, :])                      # (B, C, H)
    B, C, H = mean.shape
    plugged = mean.reshape(B, C * H)
    full = jnp.concatenate([user_embedding, plugged], axis=1)      # (B, H+C*H)
    return full @ w_full_t + bias[0]


if __name__ == "__main__":
    # Synthetic "depot": 3 attribute columns (2 scalar, 1 list), hidden=32.
    B = 64           # batch of uids
    H = 32           # hidden_size
    L = 4            # max list length
    voc_sizes = [16, 8, 12]
    scalar_cols = [0, 1]
    list_cols = [2]
    C = len(scalar_cols) + len(list_cols)
    B_TILE = 16      # grid of 4 batch tiles -> exercises the pipeline

    key = jax.random.PRNGKey(0)
    keys = jax.random.split(key, 8)

    # Embedding tables (nn.Embedding weights).
    tables = [
        0.02 * jax.random.normal(keys[i], (voc_sizes[i], H), dtype=jnp.float32)
        for i in range(C)
    ]
    # empty_embed is nn.Parameter(zeros) at init; use non-zero values here so
    # the empty-list fallback path is actually exercised by the check.
    empty_embed = 0.03 * jax.random.normal(keys[3], (1, H), dtype=jnp.float32)

    # Projection Linear(C*H + H, H):  y = x @ W.T + b,  W: (H, C*H + H)
    D_in = C * H + H
    w_lin = 0.05 * jax.random.normal(keys[4], (H, D_in), dtype=jnp.float32)
    b_lin = 0.01 * jax.random.normal(keys[5], (H,), dtype=jnp.float32)
    w_full_t = w_lin.T                                   # (D_in, H)
    bias = b_lin.reshape(1, H)

    # Kernel weight layout is [user_embedding | scalar cols | list cols]:
    # permute the row-blocks of W.T accordingly (zero-cost host glue).
    row_blocks = [w_full_t[:H]]
    for c in scalar_cols + list_cols:
        row_blocks.append(w_full_t[H + c * H: H + (c + 1) * H])
    w_kernel = jnp.concatenate(row_blocks, axis=0)       # (D_in, H)

    # Synthetic per-uid attribute values (the "depot").
    # TODO(synk): the depot dict lookup + embedding-row gather is data-dependent
    # host-side glue; it stays in plain JAX/numpy rather than in-kernel DMA.
    np_rng = np.random.RandomState(0)
    idx_col0 = np_rng.randint(0, voc_sizes[0], size=(B,))            # scalar
    idx_col1 = np_rng.randint(0, voc_sizes[1], size=(B,))            # scalar
    list_lens = np_rng.randint(0, L + 1, size=(B,))                  # list
    list_lens[0] = 0                                     # force an empty list
    idx_col2 = np_rng.randint(0, voc_sizes[2], size=(B, L))

    t0, t1, t2 = (np.asarray(t) for t in tables)

    # Incoming user_embedding (the other forward() argument).
    user_embedding = jax.random.normal(keys[6], (B, H), dtype=jnp.float32)

    # --- Kernel inputs: no mask tensor, no scalar-column list padding -------
    emb0 = t0[idx_col0]                                  # (B, H)
    emb1 = t1[idx_col1]                                  # (B, H)
    base = jnp.concatenate(
        [user_embedding, jnp.asarray(emb0), jnp.asarray(emb1)], axis=1)  # (B, 96)

    valid = (np.arange(L)[None, :] < list_lens[:, None]).astype(np.float32)
    list_rows = (t2[idx_col2] * valid[:, :, None]).astype(np.float32)  # zero pad
    list_emb = jnp.asarray(list_rows.reshape(B, 1, L, H))
    list_counts = jnp.asarray(list_lens.reshape(B, 1).astype(np.float32))

    out = user_plugin_forward(base, list_emb, list_counts, empty_embed,
                              w_kernel, bias, b_tile=B_TILE)
    out = jax.block_until_ready(out)

    # --- Reference on the original masked (B, C, L, H) representation -------
    gathered = np.zeros((B, C, L, H), dtype=np.float32)
    mask = np.zeros((B, C, L), dtype=np.float32)
    gathered[:, 0, 0, :] = emb0
    mask[:, 0, 0] = 1.0
    gathered[:, 1, 0, :] = emb1
    mask[:, 1, 0] = 1.0
    gathered[:, 2, :, :] = list_rows
    mask[:, 2, :] = valid
    ref = reference_forward(jnp.asarray(gathered), jnp.asarray(mask),
                            empty_embed, user_embedding, w_full_t, bias)

    np.testing.assert_allclose(np.asarray(out), np.asarray(ref),
                               rtol=1e-5, atol=1e-5)
    print("KERNEL_OK")
</pallas_src>

<mosaic_0001>
module attributes {stable_mosaic.version = 11 : i64} {
  func.func @_user_plugin_kernel(%arg0: i32, %arg1: memref<16x96xf32, #tpu.memory_space<vmem>>, %arg2: memref<16x1x4x32xf32, #tpu.memory_space<vmem>>, %arg3: memref<16x1xf32, #tpu.memory_space<vmem>>, %arg4: memref<1x32xf32, #tpu.memory_space<vmem>>, %arg5: memref<128x32xf32, #tpu.memory_space<vmem>>, %arg6: memref<1x32xf32, #tpu.memory_space<vmem>>, %arg7: memref<16x32xf32, #tpu.memory_space<vmem>>, %arg8: memref<16x128xf32, #tpu.memory_space<vmem>>) attributes {dimension_semantics = [#tpu.dimension_semantics<parallel>], iteration_bounds = array<i64: 4>, scalar_prefetch = 0 : i64, scratch_operands = 1 : i64, tpu.core_type = #tpu.core_type<tc>, window_params = [{transform_indices = @transform_0, window_bounds = array<i64: 16, 96>}, {transform_indices = @transform_1, window_bounds = array<i64: 16, 1, 4, 32>}, {transform_indices = @transform_2, window_bounds = array<i64: 16, 1>}, {pipeline_mode = #tpu.pipeline_mode<synchronous>, transform_indices = @transform_3, window_bounds = array<i64: 1, 32>}, {pipeline_mode = #tpu.pipeline_mode<synchronous>, transform_indices = @transform_4, window_bounds = array<i64: 128, 32>}, {pipeline_mode = #tpu.pipeline_mode<synchronous>, transform_indices = @transform_5, window_bounds = array<i64: 1, 32>}, {transform_indices = @transform_6, window_bounds = array<i64: 16, 32>}]} {
    %c0 = arith.constant 0 : index
    %c0_0 = arith.constant 0 : index
    %0 = vector.load %arg1[%c0, %c0_0] : memref<16x96xf32, #tpu.memory_space<vmem>>, vector<16x96xf32>
    %c0_1 = arith.constant 0 : index
    %c0_2 = arith.constant 0 : index
    %1 = vector.load %arg8[%c0_1, %c0_2] : memref<16x128xf32, #tpu.memory_space<vmem>>, vector<16x96xf32>
    tpu.vector_store %arg8[%c0_1, %c0_2], %0 {strides = array<i32>} : memref<16x128xf32, #tpu.memory_space<vmem>>, vector<16x96xf32>,
    %c0_3 = arith.constant 0 : index
    %c0_4 = arith.constant 0 : index
    %2 = vector.load %arg3[%c0_3, %c0_4] : memref<16x1xf32, #tpu.memory_space<vmem>>, vector<16x1xf32>
    %c0_5 = arith.constant 0 : index
    %c0_6 = arith.constant 0 : index
    %c0_7 = arith.constant 0 : index
    %c0_8 = arith.constant 0 : index
    %3 = vector.load %arg2[%c0_5, %c0_6, %c0_7, %c0_8] : memref<16x1x4x32xf32, #tpu.memory_space<vmem>>, vector<16x1x4x32xf32>
    %cst = arith.constant dense<0.000000e+00> : vector<16x1x32xf32>
    %4 = vector.multi_reduction <add>, %3, %cst [2] : vector<16x1x4x32xf32> to vector<16x1x32xf32>
    %cst_9 = arith.constant 1.000000e+00 : f32
    %5 = vector.broadcast %cst_9 : f32 to vector<16x1xf32>
    %6 = arith.maximumf %2, %5 : vector<16x1xf32>
    %7 = tpu.reciprocal %6 : vector<16x1xf32> -> vector<16x1xf32>
    %8 = vector.shape_cast %7 : vector<16x1xf32> to vector<16x1x1xf32>
    %9 = vector.broadcast %8 : vector<16x1x1xf32> to vector<16x1x32xf32>
    %10 = arith.mulf %4, %9 : vector<16x1x32xf32>
    %11 = vector.shape_cast %2 : vector<16x1xf32> to vector<16x1x1xf32>
    %cst_10 = arith.constant 0.000000e+00 : f32
    %12 = vector.broadcast %cst_10 : f32 to vector<16x1x1xf32>
    %13 = arith.cmpf ogt, %11, %12 : vector<16x1x1xf32>
    %c0_11 = arith.constant 0 : index
    %c0_12 = arith.constant 0 : index
    %14 = vector.load %arg4[%c0_11, %c0_12] : memref<1x32xf32, #tpu.memory_space<vmem>>, vector<1x32xf32>
    %15 = vector.shape_cast %14 : vector<1x32xf32> to vector<1x1x32xf32>
    %16 = vector.shape_cast %13 : vector<16x1x1xi1> to vector<16x1x1xi1>
    %17 = vector.broadcast %16 : vector<16x1x1xi1> to vector<16x1x32xi1>
    %18 = vector.shape_cast %15 : vector<1x1x32xf32> to vector<1x1x32xf32>
    %19 = vector.broadcast %18 : vector<1x1x32xf32> to vector<16x1x32xf32>
    %20 = arith.select %17, %10, %19 : vector<16x1x32xi1>, vector<16x1x32xf32>
    %21 = vector.shape_cast %20 : vector<16x1x32xf32> to vector<16x32xf32>
    %c0_13 = arith.constant 0 : index
    %c96 = arith.constant 96 : index
    %22 = vector.load %arg8[%c0_13, %c96] : memref<16x128xf32, #tpu.memory_space<vmem>>, vector<16x32xf32>
    tpu.vector_store %arg8[%c0_13, %c96], %21 {strides = array<i32>} : memref<16x128xf32, #tpu.memory_space<vmem>>, vector<16x32xf32>,
    %c0_14 = arith.constant 0 : index
    %c0_15 = arith.constant 0 : index
    %23 = vector.load %arg8[%c0_14, %c0_15] : memref<16x128xf32, #tpu.memory_space<vmem>>, vector<16x128xf32>
    %c0_16 = arith.constant 0 : index
    %c0_17 = arith.constant 0 : index
    %24 = vector.load %arg5[%c0_16, %c0_17] : memref<128x32xf32, #tpu.memory_space<vmem>>, vector<128x32xf32>
    %cst_18 = arith.constant dense<0.000000e+00> : vector<16x32xf32>
    %25 = tpu.matmul %23, %24, %cst_18 {dimension_numbers = #tpu.dot_dimension_numbers<[1], [0], [0], [1], [0, 0, 1, 1], [], []>} : vector<16x128xf32>, vector<128x32xf32>, vector<16x32xf32> -> vector<16x32xf32>
    %c0_19 = arith.constant 0 : index
    %c0_20 = arith.constant 0 : index
    %26 = vector.load %arg6[%c0_19, %c0_20] : memref<1x32xf32, #tpu.memory_space<vmem>>, vector<1x32xf32>
    %27 = vector.broadcast %26 : vector<1x32xf32> to vector<16x32xf32>
    %28 = arith.addf %25, %27 : vector<16x32xf32>
    %c0_21 = arith.constant 0 : index
    %c0_22 = arith.constant 0 : index
    %29 = vector.load %arg7[%c0_21, %c0_22] : memref<16x32xf32, #tpu.memory_space<vmem>>, vector<16x32xf32>
    tpu.vector_store %arg7[%c0_21, %c0_22], %28 {strides = array<i32>} : memref<16x32xf32, #tpu.memory_space<vmem>>, vector<16x32xf32>,
    return
  }
  func.func @transform_0(%arg0: i32) -> (i32, i32) {
    %c0_i32 = arith.constant 0 : i32
    %c0_i32_0 = arith.constant 0 : i32
    return %arg0, %c0_i32 : i32, i32
  }
  func.func @transform_1(%arg0: i32) -> (i32, i32, i32, i32) {
    %c0_i32 = arith.constant 0 : i32
    %c0_i32_0 = arith.constant 0 : i32
    %c0_i32_1 = arith.constant 0 : i32
    %c0_i32_2 = arith.constant 0 : i32
    return %arg0, %c0_i32, %c0_i32_0, %c0_i32_1 : i32, i32, i32, i32
  }
  func.func @transform_2(%arg0: i32) -> (i32, i32) {
    %c0_i32 = arith.constant 0 : i32
    %c0_i32_0 = arith.constant 0 : i32
    return %arg0, %c0_i32 : i32, i32
  }
  func.func @transform_3(%arg0: i32) -> (i32, i32) {
    %c0_i32 = arith.constant 0 : i32
    %c0_i32_0 = arith.constant 0 : i32
    %c0_i32_1 = arith.constant 0 : i32
    return %c0_i32, %c0_i32_0 : i32, i32
  }
  func.func @transform_4(%arg0: i32) -> (i32, i32) {
    %c0_i32 = arith.constant 0 : i32
    %c0_i32_0 = arith.constant 0 : i32
    %c0_i32_1 = arith.constant 0 : i32
    return %c0_i32, %c0_i32_0 : i32, i32
  }
  func.func @transform_5(%arg0: i32) -> (i32, i32) {
    %c0_i32 = arith.constant 0 : i32
    %c0_i32_0 = arith.constant 0 : i32
    %c0_i32_1 = arith.constant 0 : i32
    return %c0_i32, %c0_i32_0 : i32, i32
  }
  func.func @transform_6(%arg0: i32) -> (i32, i32) {
    %c0_i32 = arith.constant 0 : i32
    %c0_i32_0 = arith.constant 0 : i32
    return %arg0, %c0_i32 : i32, i32
  }
}

</mosaic_0001>

<llo_original>
// kernel: tpu_custom_call.1
$region0: #{tpu_custom_call.1}
  #allocation0 [shape = 'u32[]', space=smem, size = 0x4, offset = 0x4, fixed_abs, tag = 'smem constant byte address 0x4 - core index']
  #allocation1 [shape = 'u32[144,128]{1,0:T(1,128)}', space=vmem, size = 0x12000, scoped, tag = 'internal scratch']
  #allocation2 [shape = 'f32[16,128]{1,0:T(8,128)}', space=vmem, size = 0x2000, scoped, tag = 'scratch operand']
  %s0 = inlined_call_operand.vmem [shape: f32[64,96], index: 0, kind: input, shape index: {}]
  %s1 = inlined_call_operand.vmem [shape: f32[64,1,4,32], index: 1, kind: input, shape index: {}]
  %s2 = inlined_call_operand.vmem [shape: f32[64,1], index: 2, kind: input, shape index: {}]
  %s3 = inlined_call_operand.vmem [shape: f32[1,32], index: 3, kind: input, shape index: {}]
  %s4 = inlined_call_operand.vmem [shape: f32[128,32], index: 4, kind: input, shape index: {}]
  %s5 = inlined_call_operand.vmem [shape: f32[1,32], index: 5, kind: input, shape index: {}]
  %s6 = inlined_call_operand.vmem [shape: f32[64,32], index: 6, kind: output, shape index: {}]
  %s7 = sld [smem:[#allocation0]]
  $region57: #{tpu_custom_call.1} parent=0
    _
  %s9 = ssub.s32 1, %s7
  %s10 = scalar_select 0, %s9, %s7
  loop: start=0, step=1, limit=6
  $region2: #{tpu_custom_call.1} parent=0 // loop_pre_header
    _
  $region3: #{tpu_custom_call.1} parent=0 // loop_header
    %s12 = sphi 0, %s16
    %p13 = scmp.ge.s32.totalorder %s12, 6
    %s22 = sphi 0, %s24
    %s25 = sphi 0, %s22
    %s26 = sphi 0, %s25
    %s42 = sphi 0, %s26
    %s48 = sphi 0, %s50
    %s51 = sphi 0, %s48
    %s52 = sphi 0, %s51
    %s68 = sphi 0, %s52
    %s74 = sphi 0, %s76
    %s77 = sphi 0, %s74
    %s78 = sphi 0, %s77
    %s94 = sphi 0, %s78
    %s98 = sphi 0, %s98
    %s100 = sphi 0, %s98
    %s101 = sphi 0, %s100
    %s115 = sphi 0, %s101
    %s119 = sphi 0, %s119
    %s121 = sphi 0, %s119
    %s122 = sphi 0, %s121
    %s136 = sphi 0, %s122
    %s140 = sphi 0, %s140
    %s142 = sphi 0, %s140
    %s143 = sphi 0, %s142
    %s157 = sphi 0, %s143
    %s163 = sphi 0, %s165
    %s166 = sphi 0, %s163
    %s167 = sphi 0, %s166
    %s183 = sphi 0, %s167
  $region4: #{tpu_custom_call.1} parent=0 // loop_header_branch
    %15 = sbr.rel (%p13) target = $region8
  $region5: #{tpu_custom_call.1} parent=0 // loop_body
    %s17 = ssub.s32 %s12, 1
    %s18 = ssub.s32 %s12, 2
    %s19 = sadd.s32 %s12, 1
    %s20 = ssub.s32 %s12, %s19
    %p21 = scmp.eq.s32.totalorder %s20, 0
    %s23 = sadd.s32 %s22, 1
    %s24 = scalar_select %p21, %s22, %s23
    %p27 = pneg %p21
    %p28 = scmp.eq.s32.totalorder %s12, 3
    %p29 = por %p27, %p28
    %p30 = scmp.ne.s32.totalorder %s22, %s25
    %p31 = scmp.eq.s32.totalorder %s12, 0
    %p32 = por %p30, %p31
    %p33 = scmp.ne.s32.totalorder %s22, %s25
    %p34 = scmp.eq.s32.totalorder %s17, 3
    %p35 = por %p33, %p34
    %p36 = scmp.ne.s32.totalorder %s25, %s26
    %p37 = scmp.eq.s32.totalorder %s17, 0
    %p38 = por %p36, %p37
    %p39 = scmp.ne.s32.totalorder %s25, %s26
    %p40 = scmp.eq.s32.totalorder %s18, 3
    %p41 = por %p39, %p40
    %p43 = scmp.ne.s32.totalorder %s26, %s42
    %p44 = scmp.eq.s32.totalorder %s18, 0
    %p45 = por %p43, %p44
    %s46 = ssub.s32 %s12, %s19
    %p47 = scmp.eq.s32.totalorder %s46, 0
    %s49 = sadd.s32 %s48, 1
    %s50 = scalar_select %p47, %s48, %s49
    %p53 = pneg %p47
    %p54 = scmp.eq.s32.totalorder %s12, 3
    %p55 = por %p53, %p54
    %p56 = scmp.ne.s32.totalorder %s48, %s51
    %p57 = scmp.eq.s32.totalorder %s12, 0
    %p58 = por %p56, %p57
    %p59 = scmp.ne.s32.totalorder %s48, %s51
    %p60 = scmp.eq.s32.totalorder %s17, 3
    %p61 = por %p59, %p60
    %p62 = scmp.ne.s32.totalorder %s51, %s52
    %p63 = scmp.eq.s32.totalorder %s17, 0
    %p64 = por %p62, %p63
    %p65 = scmp.ne.s32.totalorder %s51, %s52
    %p66 = scmp.eq.s32.totalorder %s18, 3
    %p67 = por %p65, %p66
    %p69 = scmp.ne.s32.totalorder %s52, %s68
    %p70 = scmp.eq.s32.totalorder %s18, 0
    %p71 = por %p69, %p70
    %s72 = ssub.s32 %s12, %s19
    %p73 = scmp.eq.s32.totalorder %s72, 0
    %s75 = sadd.s32 %s74, 1
    %s76 = scalar_select %p73, %s74, %s75
    %p79 = pneg %p73
    %p80 = scmp.eq.s32.totalorder %s12, 3
    %p81 = por %p79, %p80
    %p82 = scmp.ne.s32.totalorder %s74, %s77
    %p83 = scmp.eq.s32.totalorder %s12, 0
    %p84 = por %p82, %p83
    %p85 = scmp.ne.s32.totalorder %s74, %s77
    %p86 = scmp.eq.s32.totalorder %s17, 3
    %p87 = por %p85, %p86
    %p88 = scmp.ne.s32.totalorder %s77, %s78
    %p89 = scmp.eq.s32.totalorder %s17, 0
    %p90 = por %p88, %p89
    %p91 = scmp.ne.s32.totalorder %s77, %s78
    %p92 = scmp.eq.s32.totalorder %s18, 3
    %p93 = por %p91, %p92
    %p95 = scmp.ne.s32.totalorder %s78, %s94
    %p96 = scmp.eq.s32.totalorder %s18, 0
    %p97 = por %p95, %p96
    %s99 = sadd.s32 %s98, 1
    %p102 = scmp.eq.s32.totalorder %s12, 3
    %p103 = scmp.ne.s32.totalorder %s98, %s100
    %p104 = scmp.eq.s32.totalorder %s12, 0
    %p105 = por %p103, %p104
    %p106 = scmp.ne.s32.totalorder %s98, %s100
    %p107 = scmp.eq.s32.totalorder %s17, 3
    %p108 = por %p106, %p107
    %p109 = scmp.ne.s32.totalorder %s100, %s101
    %p110 = scmp.eq.s32.totalorder %s17, 0
    %p111 = por %p109, %p110
    %p112 = scmp.ne.s32.totalorder %s100, %s101
    %p113 = scmp.eq.s32.totalorder %s18, 3
    %p114 = por %p112, %p113
    %p116 = scmp.ne.s32.totalorder %s101, %s115
    %p117 = scmp.eq.s32.totalorder %s18, 0
    %p118 = por %p116, %p117
    %s120 = sadd.s32 %s119, 1
    %p123 = scmp.eq.s32.totalorder %s12, 3
    %p124 = scmp.ne.s32.totalorder %s119, %s121
    %p125 = scmp.eq.s32.totalorder %s12, 0
    %p126 = por %p124, %p125
    %p127 = scmp.ne.s32.totalorder %s119, %s121
    %p128 = scmp.eq.s32.totalorder %s17, 3
    %p129 = por %p127, %p128
    %p130 = scmp.ne.s32.totalorder %s121, %s122
    %p131 = scmp.eq.s32.totalorder %s17, 0
    %p132 = por %p130, %p131
    %p133 = scmp.ne.s32.totalorder %s121, %s122
    %p134 = scmp.eq.s32.totalorder %s18, 3
    %p135 = por %p133, %p134
    %p137 = scmp.ne.s32.totalorder %s122, %s136
    %p138 = scmp.eq.s32.totalorder %s18, 0
    %p139 = por %p137, %p138
    %s141 = sadd.s32 %s140, 1
    %p144 = scmp.eq.s32.totalorder %s12, 3
    %p145 = scmp.ne.s32.totalorder %s140, %s142
    %p146 = scmp.eq.s32.totalorder %s12, 0
    %p147 = por %p145, %p146
    %p148 = scmp.ne.s32.totalorder %s140, %s142
    %p149 = scmp.eq.s32.totalorder %s17, 3
    %p150 = por %p148, %p149
    %p151 = scmp.ne.s32.totalorder %s142, %s143
    %p152 = scmp.eq.s32.totalorder %s17, 0
    %p153 = por %p151, %p152
    %p154 = scmp.ne.s32.totalorder %s142, %s143
    %p155 = scmp.eq.s32.totalorder %s18, 3
    %p156 = por %p154, %p155
    %p158 = scmp.ne.s32.totalorder %s143, %s157
    %p159 = scmp.eq.s32.totalorder %s18, 0
    %p160 = por %p158, %p159
    %s161 = ssub.s32 %s12, %s19
    %p162 = scmp.eq.s32.totalorder %s161, 0
    %s164 = sadd.s32 %s163, 1
    %s165 = scalar_select %p162, %s163, %s164
    %p168 = pneg %p162
    %p169 = scmp.eq.s32.totalorder %s12, 3
    %p170 = por %p168, %p169
    %p171 = scmp.ne.s32.totalorder %s163, %s166
    %p172 = scmp.eq.s32.totalorder %s12, 0
    %p173 = por %p171, %p172
    %p174 = scmp.ne.s32.totalorder %s163, %s166
    %p175 = scmp.eq.s32.totalorder %s17, 3
    %p176 = por %p174, %p175
    %p177 = scmp.ne.s32.totalorder %s166, %s167
    %p178 = scmp.eq.s32.totalorder %s17, 0
    %p179 = por %p177, %p178
    %p180 = scmp.ne.s32.totalorder %s166, %s167
    %p181 = scmp.eq.s32.totalorder %s18, 3
    %p182 = por %p180, %p181
    %p184 = scmp.ne.s32.totalorder %s167, %s183
    %p185 = scmp.eq.s32.totalorder %s18, 0
    %p186 = por %p184, %p185
    %p187 = scmp.le.s32.totalorder 1, %s12
    %p188 = scmp.lt.s32.totalorder %s12, 5
    %p189 = pnand %p187, %p188
    %p190 = pneg %p189
    // Predicated region
    $region9: #{tpu_custom_call.1} parent=5 // pred_check
      _
    $region10: #{tpu_custom_call.1} parent=5 // pred_check_branch
      %192 = sbr.rel (%p189) target = $region12
    $region11: #{tpu_custom_call.1} parent=5 // pred_region
      %s193 = ssub.s32 %s12, 1
      // Predicated region
      $region13: #{tpu_custom_call.1} parent=11 // pred_check
        %p194 = pneg %p111
      $region14: #{tpu_custom_call.1} parent=11 // pred_check_branch
        %196 = sbr.rel (%p194) target = $region16
      $region15: #{tpu_custom_call.1} parent=11 // pred_region
        _
      $region16: #{tpu_custom_call.1} parent=11 // pred_fallthru
        _
      // Predicated region
      $region17: #{tpu_custom_call.1} parent=11 // pred_check
        %p197 = pneg %p132
      $region18: #{tpu_custom_call.1} parent=11 // pred_check_branch
        %199 = sbr.rel (%p197) target = $region20
      $region19: #{tpu_custom_call.1} parent=11 // pred_region
        _
      $region20: #{tpu_custom_call.1} parent=11 // pred_fallthru
        _
      // Predicated region
      $region21: #{tpu_custom_call.1} parent=11 // pred_check
        %p200 = pneg %p153
      $region22: #{tpu_custom_call.1} parent=11 // pred_check_branch
        %202 = sbr.rel (%p200) target = $region24
      $region23: #{tpu_custom_call.1} parent=11 // pred_region
        _
      $region24: #{tpu_custom_call.1} parent=11 // pred_fallthru
        _
    $region12: #{tpu_custom_call.1} parent=5 // pred_fallthru
      _
    %p203 = scmp.lt.s32.totalorder %s12, 4
    // Predicated region
    $region25: #{tpu_custom_call.1} parent=5 // pred_check
      %p204 = pneg %p203
    $region26: #{tpu_custom_call.1} parent=5 // pred_check_branch
      %206 = sbr.rel (%p204) target = $region28
    $region27: #{tpu_custom_call.1} parent=5 // pred_region
      // Predicated region
      $region29: #{tpu_custom_call.1} parent=27 // pred_check
        %p207 = pneg %p32
      $region30: #{tpu_custom_call.1} parent=27 // pred_check_branch
        %209 = sbr.rel (%p207) target = $region32
      $region31: #{tpu_custom_call.1} parent=27 // pred_region
        %s210 = smul.u32 2, %s12
        %p211 = scmp.lt.s32.totalorder %s210, 7
        %s212 = scalar_select %p211, %s210, 7
        %s213 = smul.addr %s212, 8
        %s214 = scalar_lea.vmem %s0, %s213
        %s215 = smul.u32 2, %s12
      $region32: #{tpu_custom_call.1} parent=27 // pred_fallthru
        _
      // Predicated region
      $region33: #{tpu_custom_call.1} parent=27 // pred_check
        %p216 = pneg %p58
      $region34: #{tpu_custom_call.1} parent=27 // pred_check_branch
        %218 = sbr.rel (%p216) target = $region36
      $region35: #{tpu_custom_call.1} parent=27 // pred_region
        %s219 = smul.u32 16, %s12
        %p220 = scmp.lt.s32.totalorder %s219, 63
        %s221 = scalar_select %p220, %s219, 63
        %s222 = smul.addr %s221, 4
        %s223 = scalar_lea.vmem %s1, %s222
        %s224 = smul.u32 16, %s12
      $region36: #{tpu_custom_call.1} parent=27 // pred_fallthru
        _
      // Predicated region
      $region37: #{tpu_custom_call.1} parent=27 // pred_check
        %p225 = pneg %p84
      $region38: #{tpu_custom_call.1} parent=27 // pred_check_branch
        %227 = sbr.rel (%p225) target = $region40
      $region39: #{tpu_custom_call.1} parent=27 // pred_region
        %s228 = smul.u32 2, %s12
        %p229 = scmp.lt.s32.totalorder %s228, 7
        %s230 = scalar_select %p229, %s228, 7
        %s231 = smul.addr %s230, 8
        %s232 = scalar_lea.vmem %s2, %s231
        %s233 = smul.u32 2, %s12
      $region40: #{tpu_custom_call.1} parent=27 // pred_fallthru
        _
    $region28: #{tpu_custom_call.1} parent=5 // pred_fallthru
      _
    %p234 = scmp.le.s32.totalorder 1, %s12
    %p235 = scmp.lt.s32.totalorder %s12, 5
    %p236 = pnand %p234, %p235
    %p237 = pneg %p236
    // Predicated region
    $region41: #{tpu_custom_call.1} parent=5 // pred_check
      _
    $region42: #{tpu_custom_call.1} parent=5 // pred_check_branch
      %239 = sbr.rel (%p236) target = $region44
    $region43: #{tpu_custom_call.1} parent=5 // pred_region
      %s240 = ssub.s32 %s12, 1
      %s241 = smul.u32 2, %s17
      %p242 = scmp.lt.s32.totalorder %s241, 7
      %s243 = scalar_select %p242, %s241, 7
      %s244 = smul.addr %s243, 8
      %s245 = scalar_lea.vmem %s0, %s244
      %p246 = pneg %p38
      %p247 = pneg %p35
      %s248 = smul.u32 16, %s17
      %p249 = scmp.lt.s32.totalorder %s248, 63
      %s250 = scalar_select %p249, %s248, 63
      %s251 = smul.addr %s250, 4
      %s252 = scalar_lea.vmem %s1, %s251
      %p253 = pneg %p64
      %p254 = pneg %p61
      %s255 = smul.u32 2, %s17
      %p256 = scmp.lt.s32.totalorder %s255, 7
      %s257 = scalar_select %p256, %s255, 7
      %s258 = smul.addr %s257, 8
      %s259 = scalar_lea.vmem %s2, %s258
      %p260 = pneg %p90
      %p261 = pneg %p87
      %p262 = pneg %p111
      %p263 = pneg %p108
      %p264 = pneg %p132
      %p265 = pneg %p129
      %p266 = pneg %p153
      %p267 = pneg %p150
      %p268 = pneg %p179
      %p269 = pneg %p176
      %s270 = smul.u32 2, %s17
      %p271 = scmp.lt.s32.totalorder %s270, 7
      %s272 = scalar_select %p271, %s270, 7
      %s273 = smul.addr %s272, 8
      %s274 = scalar_lea.vmem %s6, %s273
      %s275 = smul.u32 2, %s17
      %p276 = scmp.lt.s32.totalorder %s275, 7
      %s277 = scalar_select %p276, %s275, 7
      %s278 = smul.addr %s277, 8
      %s279 = scalar_lea.vmem %s0, %s278
      %s280 = smul.u32 2, %s17
      %s281 = smul.u32 16, %s17
      %p282 = scmp.lt.s32.totalorder %s281, 63
      %s283 = scalar_select %p282, %s281, 63
      %s284 = smul.addr %s283, 4
      %s285 = scalar_lea.vmem %s1, %s284
      %s286 = smul.u32 16, %s17
      %s287 = smul.u32 2, %s17
      %p288 = scmp.lt.s32.totalorder %s287, 7
      %s289 = scalar_select %p288, %s287, 7
      %s290 = smul.addr %s289, 8
      %s291 = scalar_lea.vmem %s2, %s290
      %s292 = smul.u32 2, %s17
      %s293 = smul.u32 2, %s17
      %p294 = scmp.lt.s32.totalorder %s293, 7
      %s295 = scalar_select %p294, %s293, 7
      %s296 = smul.addr %s295, 8
      %s297 = scalar_lea.vmem %s6, %s296
      %s298 = smul.u32 2, %s17
      %v299 = vld [vmem:[%s279] sm:$0xff]
      %v300 = vld [vmem:[%s279 + $0x8] sm:$0xff]
      %vm301 = vcmask 785408
      %302 = vst.msk [vmem:[#allocation2] sm:$0xff] %vm301, %v299
      %303 = vst.msk [vmem:[#allocation2 + $0x8] sm:$0xff] %vm301, %v300
      %v304 = vld [vmem:[%s291] sm:$0xff]
      %v305 = vld [vmem:[%s291 + $0x8] sm:$0xff]
      %v306 = vld [vmem:[%s285] sm:$0xf]
      %v307 = vld [vmem:[%s285 + $0x4] sm:$0xf]
      %v308 = vld [vmem:[%s285 + $0x8] sm:$0xf]
      %v309 = vld [vmem:[%s285 + $0xc] sm:$0xf]
      %v310 = vld [vmem:[%s285 + $0x10] sm:$0xf]
      %v311 = vld [vmem:[%s285 + $0x14] sm:$0xf]
      %v312 = vld [vmem:[%s285 + $0x18] sm:$0xf]
      %v313 = vld [vmem:[%s285 + $0x1c] sm:$0xf]
      %v314 = vld [vmem:[%s285 + $0x20] sm:$0xf]
      %v315 = vld [vmem:[%s285 + $0x24] sm:$0xf]
      %v316 = vld [vmem:[%s285 + $0x28] sm:$0xf]
      %v317 = vld [vmem:[%s285 + $0x2c] sm:$0xf]
      %v318 = vld [vmem:[%s285 + $0x30] sm:$0xf]
      %v319 = vld [vmem:[%s285 + $0x34] sm:$0xf]
      %v320 = vld [vmem:[%s285 + $0x38] sm:$0xf]
      %v321 = vld [vmem:[%s285 + $0x3c] sm:$0xf]
      %vm322 = vcmask 257024
      %v323 = vsel %vm322, %v306, 0.0
      %v324 = vrot.slane %v323, 4
      %v325 = vadd.f32 %v323, %v324
      %v326 = vrot.slane %v325, 2
      %v327 = vadd.f32 %v325, %v326
      %v328 = vrot.slane %v327, 1
      %v329 = vadd.f32 %v327, %v328
      %v330 = vsel %vm322, %v307, 0.0
      %v331 = vrot.slane %v330, 4
      %v332 = vadd.f32 %v330, %v331
      %v333 = vrot.slane %v332, 2
      %v334 = vadd.f32 %v332, %v333
      %v335 = vrot.slane %v334, 1
      %v336 = vadd.f32 %v334, %v335
      %v337 = vsel %vm322, %v308, 0.0
      %v338 = vrot.slane %v337, 4
      %v339 = vadd.f32 %v337, %v338
      %v340 = vrot.slane %v339, 2
      %v341 = vadd.f32 %v339, %v340
      %v342 = vrot.slane %v341, 1
      %v343 = vadd.f32 %v341, %v342
      %v344 = vsel %vm322, %v309, 0.0
      %v345 = vrot.slane %v344, 4
      %v346 = vadd.f32 %v344, %v345
      %v347 = vrot.slane %v346, 2
      %v348 = vadd.f32 %v346, %v347
      %v349 = vrot.slane %v348, 1
      %v350 = vadd.f32 %v348, %v349
      %v351 = vsel %vm322, %v310, 0.0
      %v352 = vrot.slane %v351, 4
      %v353 = vadd.f32 %v351, %v352
      %v354 = vrot.slane %v353, 2
      %v355 = vadd.f32 %v353, %v354
      %v356 = vrot.slane %v355, 1
      %v357 = vadd.f32 %v355, %v356
      %v358 = vsel %vm322, %v311, 0.0
      %v359 = vrot.slane %v358, 4
      %v360 = vadd.f32 %v358, %v359
      %v361 = vrot.slane %v360, 2
      %v362 = vadd.f32 %v360, %v361
      %v363 = vrot.slane %v362, 1
      %v364 = vadd.f32 %v362, %v363
      %v365 = vsel %vm322, %v312, 0.0
      %v366 = vrot.slane %v365, 4
      %v367 = vadd.f32 %v365, %v366
      %v368 = vrot.slane %v367, 2
      %v369 = vadd.f32 %v367, %v368
      %v370 = vrot.slane %v369, 1
      %v371 = vadd.f32 %v369, %v370
      %v372 = vsel %vm322, %v313, 0.0
      %v373 = vrot.slane %v372, 4
      %v374 = vadd.f32 %v372, %v373
      %v375 = vrot.slane %v374, 2
      %v376 = vadd.f32 %v374, %v375
      %v377 = vrot.slane %v376, 1
      %v378 = vadd.f32 %v376, %v377
      %v379 = vsel %vm322, %v314, 0.0
      %v380 = vrot.slane %v379, 4
      %v381 = vadd.f32 %v379, %v380
      %v382 = vrot.slane %v381, 2
      %v383 = vadd.f32 %v381, %v382
      %v384 = vrot.slane %v383, 1
      %v385 = vadd.f32 %v383, %v384
      %v386 = vsel %vm322, %v315, 0.0
      %v387 = vrot.slane %v386, 4
      %v388 = vadd.f32 %v386, %v387
      %v389 = vrot.slane %v388, 2
      %v390 = vadd.f32 %v388, %v389
      %v391 = vrot.slane %v390, 1
      %v392 = vadd.f32 %v390, %v391
      %v393 = vsel %vm322, %v316, 0.0
      %v394 = vrot.slane %v393, 4
      %v395 = vadd.f32 %v393, %v394
      %v396 = vrot.slane %v395, 2
      %v397 = vadd.f32 %v395, %v396
      %v398 = vrot.slane %v397, 1
      %v399 = vadd.f32 %v397, %v398
      %v400 = vsel %vm322, %v317, 0.0
      %v401 = vrot.slane %v400, 4
      %v402 = vadd.f32 %v400, %v401
      %v403 = vrot.slane %v402, 2
      %v404 = vadd.f32 %v402, %v403
      %v405 = vrot.slane %v404, 1
      %v406 = vadd.f32 %v404, %v405
      %v407 = vsel %vm322, %v318, 0.0
      %v408 = vrot.slane %v407, 4
      %v409 = vadd.f32 %v407, %v408
      %v410 = vrot.slane %v409, 2
      %v411 = vadd.f32 %v409, %v410
      %v412 = vrot.slane %v411, 1
      %v413 = vadd.f32 %v411, %v412
      %v414 = vsel %vm322, %v319, 0.0
      %v415 = vrot.slane %v414, 4
      %v416 = vadd.f32 %v414, %v415
      %v417 = vrot.slane %v416, 2
      %v418 = vadd.f32 %v416, %v417
      %v419 = vrot.slane %v418, 1
      %v420 = vadd.f32 %v418, %v419
      %v421 = vsel %vm322, %v320, 0.0
      %v422 = vrot.slane %v421, 4
      %v423 = vadd.f32 %v421, %v422
      %v424 = vrot.slane %v423, 2
      %v425 = vadd.f32 %v423, %v424
      %v426 = vrot.slane %v425, 1
      %v427 = vadd.f32 %v425, %v426
      %v428 = vsel %vm322, %v321, 0.0
      %v429 = vrot.slane %v428, 4
      %v430 = vadd.f32 %v428, %v429
      %v431 = vrot.slane %v430, 2
      %v432 = vadd.f32 %v430, %v431
      %v433 = vrot.slane %v432, 1
      %v434 = vadd.f32 %v432, %v433
      %v435 = vmax.f32 %v304, 1.0
      %v436 = vmax.f32 %v305, 1.0
      %v437 = vrcp.pop %v435
      %v438 = vrcp.pop %v436
      %v441 = vcombine.high %v437, %v437
      %v443 = vunpack.c.l.s4 1966171168
      %v444 = vunpack.c.0.s8 %v443
      %v445 = vlaneseq
      %v446 = vshrl.u32 %v445, 7
      %v447 = vsub.s32 %v444, %v446
      %v448 = vrot.slane %v437, %v447
      %v450 = vunpack.c.l.s4 1966171168
      %v451 = vunpack.c.0.s8 %v450
      %v452 = vlaneseq
      %v453 = vshrl.u32 %v452, 7
      %v454 = vsub.s32 %v451, %v453
      %v455 = vrot.slane %v441, %v454
      %v456 = vcombine.high %v448, %v448
      %v457 = vcombine.high %v455, %v455
      %v459 = vunpack.c.l.s4 1966171168
      %v460 = vunpack.c.0.s8 %v459
      %v461 = vlaneseq
      %v462 = vshrl.u32 %v461, 7
      %v463 = vsub.s32 %v460, %v462
      %v464 = vrot.slane %v448, %v463
      %v466 = vunpack.c.l.s4 1966171168
      %v467 = vunpack.c.0.s8 %v466
      %v468 = vlaneseq
      %v469 = vshrl.u32 %v468, 7
      %v470 = vsub.s32 %v467, %v469
      %v471 = vrot.slane %v455, %v470
      %v473 = vunpack.c.l.s4 1966171168
      %v474 = vunpack.c.0.s8 %v473
      %v475 = vlaneseq
      %v476 = vshrl.u32 %v475, 7
      %v477 = vsub.s32 %v474, %v476
      %v478 = vrot.slane %v456, %v477
      %v480 = vunpack.c.l.s4 1966171168
      %v481 = vunpack.c.0.s8 %v480
      %v482 = vlaneseq
      %v483 = vshrl.u32 %v482, 7
      %v484 = vsub.s32 %v481, %v483
      %v485 = vrot.slane %v457, %v484
      %v486 = vcombine.high %v464, %v464
      %v487 = vcombine.high %v471, %v471
      %v488 = vcombine.high %v478, %v478
      %v489 = vcombine.high %v485, %v485
      %v490 = vcombine.high %v438, %v438
      %v492 = vunpack.c.l.s4 1966171168
      %v493 = vunpack.c.0.s8 %v492
      %v494 = vlaneseq
      %v495 = vshrl.u32 %v494, 7
      %v496 = vsub.s32 %v493, %v495
      %v497 = vrot.slane %v438, %v496
      %v499 = vunpack.c.l.s4 1966171168
      %v500 = vunpack.c.0.s8 %v499
      %v501 = vlaneseq
      %v502 = vshrl.u32 %v501, 7
      %v503 = vsub.s32 %v500, %v502
      %v504 = vrot.slane %v490, %v503
      %v505 = vcombine.high %v497, %v497
      %v506 = vcombine.high %v504, %v504
      %v508 = vunpack.c.l.s4 1966171168
      %v509 = vunpack.c.0.s8 %v508
      %v510 = vlaneseq
      %v511 = vshrl.u32 %v510, 7
      %v512 = vsub.s32 %v509, %v511
      %v513 = vrot.slane %v497, %v512
      %v515 = vunpack.c.l.s4 1966171168
      %v516 = vunpack.c.0.s8 %v515
      %v517 = vlaneseq
      %v518 = vshrl.u32 %v517, 7
      %v519 = vsub.s32 %v516, %v518
      %v520 = vrot.slane %v504, %v519
      %v522 = vunpack.c.l.s4 1966171168
      %v523 = vunpack.c.0.s8 %v522
      %v524 = vlaneseq
      %v525 = vshrl.u32 %v524, 7
      %v526 = vsub.s32 %v523, %v525
      %v527 = vrot.slane %v505, %v526
      %v529 = vunpack.c.l.s4 1966171168
      %v530 = vunpack.c.0.s8 %v529
      %v531 = vlaneseq
      %v532 = vshrl.u32 %v531, 7
      %v533 = vsub.s32 %v530, %v532
      %v534 = vrot.slane %v506, %v533
      %v535 = vcombine.high %v513, %v513
      %v536 = vcombine.high %v520, %v520
      %v537 = vcombine.high %v527, %v527
      %v538 = vcombine.high %v534, %v534
      %539 = vset.pattern.permute.xlu0 0
      %540 = vperm.xlu0 %539, %v464
      %v541 = vpop.permute.xlu0 %540
      %v543 = vlaneseq
      %v544 = vshrl.u32 %v543, 7
      %v545 = vsub.s32 0, %v544
      %v546 = vrot.slane %v541, %v545
      %547 = vset.pattern.permute.xlu0 0
      %548 = vperm.xlu0 %547, %v478
      %v549 = vpop.permute.xlu0 %548
      %v551 = vlaneseq
      %v552 = vshrl.u32 %v551, 7
      %v553 = vsub.s32 0, %v552
      %v554 = vrot.slane %v549, %v553
      %555 = vset.pattern.permute.xlu0 0
      %556 = vperm.xlu0 %555, %v486
      %v557 = vpop.permute.xlu0 %556
      %v559 = vlaneseq
      %v560 = vshrl.u32 %v559, 7
      %v561 = vsub.s32 0, %v560
      %v562 = vrot.slane %v557, %v561
      %563 = vset.pattern.permute.xlu0 0
      %564 = vperm.xlu0 %563, %v488
      %v565 = vpop.permute.xlu0 %564
      %v567 = vlaneseq
      %v568 = vshrl.u32 %v567, 7
      %v569 = vsub.s32 0, %v568
      %v570 = vrot.slane %v565, %v569
      %571 = vset.pattern.permute.xlu0 0
      %572 = vperm.xlu0 %571, %v471
      %v573 = vpop.permute.xlu0 %572
      %v575 = vlaneseq
      %v576 = vshrl.u32 %v575, 7
      %v577 = vsub.s32 0, %v576
      %v578 = vrot.slane %v573, %v577
      %579 = vset.pattern.permute.xlu0 0
      %580 = vperm.xlu0 %579, %v485
      %v581 = vpop.permute.xlu0 %580
      %v583 = vlaneseq
      %v584 = vshrl.u32 %v583, 7
      %v585 = vsub.s32 0, %v584
      %v586 = vrot.slane %v581, %v585
      %587 = vset.pattern.permute.xlu0 0
      %588 = vperm.xlu0 %587, %v487
      %v589 = vpop.permute.xlu0 %588
      %v591 = vlaneseq
      %v592 = vshrl.u32 %v591, 7
      %v593 = vsub.s32 0, %v592
      %v594 = vrot.slane %v589, %v593
      %595 = vset.pattern.permute.xlu0 0
      %596 = vperm.xlu0 %595, %v489
      %v597 = vpop.permute.xlu0 %596
      %v599 = vlaneseq
      %v600 = vshrl.u32 %v599, 7
      %v601 = vsub.s32 0, %v600
      %v602 = vrot.slane %v597, %v601
      %603 = vset.pattern.permute.xlu0 0
      %604 = vperm.xlu0 %603, %v513
      %v605 = vpop.permute.xlu0 %604
      %v607 = vlaneseq
      %v608 = vshrl.u32 %v607, 7
      %v609 = vsub.s32 0, %v608
      %v610 = vrot.slane %v605, %v609
      %611 = vset.pattern.permute.xlu0 0
      %612 = vperm.xlu0 %611, %v527
      %v613 = vpop.permute.xlu0 %612
      %v615 = vlaneseq
      %v616 = vshrl.u32 %v615, 7
      %v617 = vsub.s32 0, %v616
      %v618 = vrot.slane %v613, %v617
      %619 = vset.pattern.permute.xlu0 0
      %620 = vperm.xlu0 %619, %v535
      %v621 = vpop.permute.xlu0 %620
      %v623 = vlaneseq
      %v624 = vshrl.u32 %v623, 7
      %v625 = vsub.s32 0, %v624
      %v626 = vrot.slane %v621, %v625
      %627 = vset.pattern.permute.xlu0 0
      %628 = vperm.xlu0 %627, %v537
      %v629 = vpop.permute.xlu0 %628
      %v631 = vlaneseq
      %v632 = vshrl.u32 %v631, 7
      %v633 = vsub.s32 0, %v632
      %v634 = vrot.slane %v629, %v633
      %635 = vset.pattern.permute.xlu0 0
      %636 = vperm.xlu0 %635, %v520
      %v637 = vpop.permute.xlu0 %636
      %v639 = vlaneseq
      %v640 = vshrl.u32 %v639, 7
      %v641 = vsub.s32 0, %v640
      %v642 = vrot.slane %v637, %v641
      %643 = vset.pattern.permute.xlu0 0
      %644 = vperm.xlu0 %643, %v534
      %v645 = vpop.permute.xlu0 %644
      %v647 = vlaneseq
      %v648 = vshrl.u32 %v647, 7
      %v649 = vsub.s32 0, %v648
      %v650 = vrot.slane %v645, %v649
      %651 = vset.pattern.permute.xlu0 0
      %652 = vperm.xlu0 %651, %v536
      %v653 = vpop.permute.xlu0 %652
      %v655 = vlaneseq
      %v656 = vshrl.u32 %v655, 7
      %v657 = vsub.s32 0, %v656
      %v658 = vrot.slane %v653, %v657
      %659 = vset.pattern.permute.xlu0 0
      %660 = vperm.xlu0 %659, %v538
      %v661 = vpop.permute.xlu0 %660
      %v663 = vlaneseq
      %v664 = vshrl.u32 %v663, 7
      %v665 = vsub.s32 0, %v664
      %v666 = vrot.slane %v661, %v665
      %v667 = vmul.f32 %v329, %v546
      %v668 = vmul.f32 %v336, %v554
      %v669 = vmul.f32 %v343, %v562
      %v670 = vmul.f32 %v350, %v570
      %v671 = vmul.f32 %v357, %v578
      %v672 = vmul.f32 %v364, %v586
      %v673 = vmul.f32 %v371, %v594
      %v674 = vmul.f32 %v378, %v602
      %v675 = vmul.f32 %v385, %v610
      %v676 = vmul.f32 %v392, %v618
      %v677 = vmul.f32 %v399, %v626
      %v678 = vmul.f32 %v406, %v634
      %v679 = vmul.f32 %v413, %v642
      %v680 = vmul.f32 %v420, %v650
      %v681 = vmul.f32 %v427, %v658
      %v682 = vmul.f32 %v434, %v666
      %v685 = vcombine.high %v304, %v304
      %v687 = vunpack.c.l.s4 1966171168
      %v688 = vunpack.c.0.s8 %v687
      %v689 = vlaneseq
      %v690 = vshrl.u32 %v689, 7
      %v691 = vsub.s32 %v688, %v690
      %v692 = vrot.slane %v304, %v691
      %v694 = vunpack.c.l.s4 1966171168
      %v695 = vunpack.c.0.s8 %v694
      %v696 = vlaneseq
      %v697 = vshrl.u32 %v696, 7
      %v698 = vsub.s32 %v695, %v697
      %v699 = vrot.slane %v685, %v698
      %v700 = vcombine.high %v692, %v692
      %v701 = vcombine.high %v699, %v699
      %v703 = vunpack.c.l.s4 1966171168
      %v704 = vunpack.c.0.s8 %v703
      %v705 = vlaneseq
      %v706 = vshrl.u32 %v705, 7
      %v707 = vsub.s32 %v704, %v706
      %v708 = vrot.slane %v692, %v707
      %v710 = vunpack.c.l.s4 1966171168
      %v711 = vunpack.c.0.s8 %v710
      %v712 = vlaneseq
      %v713 = vshrl.u32 %v712, 7
      %v714 = vsub.s32 %v711, %v713
      %v715 = vrot.slane %v699, %v714
      %v717 = vunpack.c.l.s4 1966171168
      %v718 = vunpack.c.0.s8 %v717
      %v719 = vlaneseq
      %v720 = vshrl.u32 %v719, 7
      %v721 = vsub.s32 %v718, %v720
      %v722 = vrot.slane %v700, %v721
      %v724 = vunpack.c.l.s4 1966171168
      %v725 = vunpack.c.0.s8 %v724
      %v726 = vlaneseq
      %v727 = vshrl.u32 %v726, 7
      %v728 = vsub.s32 %v725, %v727
      %v729 = vrot.slane %v701, %v728
      %v730 = vcombine.high %v708, %v708
      %v731 = vcombine.high %v715, %v715
      %v732 = vcombine.high %v722, %v722
      %v733 = vcombine.high %v729, %v729
      %v734 = vcombine.high %v305, %v305
      %v736 = vunpack.c.l.s4 1966171168
      %v737 = vunpack.c.0.s8 %v736
      %v738 = vlaneseq
      %v739 = vshrl.u32 %v738, 7
      %v740 = vsub.s32 %v737, %v739
      %v741 = vrot.slane %v305, %v740
      %v743 = vunpack.c.l.s4 1966171168
      %v744 = vunpack.c.0.s8 %v743
      %v745 = vlaneseq
      %v746 = vshrl.u32 %v745, 7
      %v747 = vsub.s32 %v744, %v746
      %v748 = vrot.slane %v734, %v747
      %v749 = vcombine.high %v741, %v741
      %v750 = vcombine.high %v748, %v748
      %v752 = vunpack.c.l.s4 1966171168
      %v753 = vunpack.c.0.s8 %v752
      %v754 = vlaneseq
      %v755 = vshrl.u32 %v754, 7
      %v756 = vsub.s32 %v753, %v755
      %v757 = vrot.slane %v741, %v756
      %v759 = vunpack.c.l.s4 1966171168
      %v760 = vunpack.c.0.s8 %v759
      %v761 = vlaneseq
      %v762 = vshrl.u32 %v761, 7
      %v763 = vsub.s32 %v760, %v762
      %v764 = vrot.slane %v748, %v763
      %v766 = vunpack.c.l.s4 1966171168
      %v767 = vunpack.c.0.s8 %v766
      %v768 = vlaneseq
      %v769 = vshrl.u32 %v768, 7
      %v770 = vsub.s32 %v767, %v769
      %v771 = vrot.slane %v749, %v770
      %v773 = vunpack.c.l.s4 1966171168
      %v774 = vunpack.c.0.s8 %v773
      %v775 = vlaneseq
      %v776 = vshrl.u32 %v775, 7
      %v777 = vsub.s32 %v774, %v776
      %v778 = vrot.slane %v750, %v777
      %v779 = vcombine.high %v757, %v757
      %v780 = vcombine.high %v764, %v764
      %v781 = vcombine.high %v771, %v771
      %v782 = vcombine.high %v778, %v778
      %vm799 = vcmp.gt.f32.partialorder %v708, 0.0
      %vm800 = vcmp.gt.f32.partialorder %v722, 0.0
      %vm801 = vcmp.gt.f32.partialorder %v730, 0.0
      %vm802 = vcmp.gt.f32.partialorder %v732, 0.0
      %vm803 = vcmp.gt.f32.partialorder %v715, 0.0
      %vm804 = vcmp.gt.f32.partialorder %v729, 0.0
      %vm805 = vcmp.gt.f32.partialorder %v731, 0.0
      %vm806 = vcmp.gt.f32.partialorder %v733, 0.0
      %vm807 = vcmp.gt.f32.partialorder %v757, 0.0
      %vm808 = vcmp.gt.f32.partialorder %v771, 0.0
      %vm809 = vcmp.gt.f32.partialorder %v779, 0.0
      %vm810 = vcmp.gt.f32.partialorder %v781, 0.0
      %vm811 = vcmp.gt.f32.partialorder %v764, 0.0
      %vm812 = vcmp.gt.f32.partialorder %v778, 0.0
      %vm813 = vcmp.gt.f32.partialorder %v780, 0.0
      %vm814 = vcmp.gt.f32.partialorder %v782, 0.0
      %v815 = vld [vmem:[%s3] sm:$0x1]
      %v816 = vsel %vm799, 1, 0
      %v817 = vsel %vm800, 1, 0
      %v818 = vsel %vm801, 1, 0
      %v819 = vsel %vm802, 1, 0
      %v820 = vsel %vm803, 1, 0
      %v821 = vsel %vm804, 1, 0
      %v822 = vsel %vm805, 1, 0
      %v823 = vsel %vm806, 1, 0
      %v824 = vsel %vm807, 1, 0
      %v825 = vsel %vm808, 1, 0
      %v826 = vsel %vm809, 1, 0
      %v827 = vsel %vm810, 1, 0
      %v828 = vsel %vm811, 1, 0
      %v829 = vsel %vm812, 1, 0
      %v830 = vsel %vm813, 1, 0
      %v831 = vsel %vm814, 1, 0
      %832 = vset.pattern.permute.xlu0 0
      %833 = vperm.xlu0 %832, %v816
      %v834 = vpop.permute.xlu0 %833
      %v835 = vlaneseq
      %v836 = vshrl.u32 %v835, 7
      %v837 = vsub.s32 0, %v836
      %v838 = vrot.slane %v834, %v837
      %839 = vset.pattern.permute.xlu0 0
      %840 = vperm.xlu0 %839, %v817
      %v841 = vpop.permute.xlu0 %840
      %v842 = vlaneseq
      %v843 = vshrl.u32 %v842, 7
      %v844 = vsub.s32 0, %v843
      %v845 = vrot.slane %v841, %v844
      %846 = vset.pattern.permute.xlu0 0
      %847 = vperm.xlu0 %846, %v818
      %v848 = vpop.permute.xlu0 %847
      %v849 = vlaneseq
      %v850 = vshrl.u32 %v849, 7
      %v851 = vsub.s32 0, %v850
      %v852 = vrot.slane %v848, %v851
      %853 = vset.pattern.permute.xlu0 0
      %854 = vperm.xlu0 %853, %v819
      %v855 = vpop.permute.xlu0 %854
      %v856 = vlaneseq
      %v857 = vshrl.u32 %v856, 7
      %v858 = vsub.s32 0, %v857
      %v859 = vrot.slane %v855, %v858
      %860 = vset.pattern.permute.xlu0 0
      %861 = vperm.xlu0 %860, %v820
      %v862 = vpop.permute.xlu0 %861
      %v863 = vlaneseq
      %v864 = vshrl.u32 %v863, 7
      %v865 = vsub.s32 0, %v864
      %v866 = vrot.slane %v862, %v865
      %867 = vset.pattern.permute.xlu0 0
      %868 = vperm.xlu0 %867, %v821
      %v869 = vpop.permute.xlu0 %868
      %v870 = vlaneseq
      %v871 = vshrl.u32 %v870, 7
      %v872 = vsub.s32 0, %v871
      %v873 = vrot.slane %v869, %v872
      %874 = vset.pattern.permute.xlu0 0
      %875 = vperm.xlu0 %874, %v822
      %v876 = vpop.permute.xlu0 %875
      %v877 = vlaneseq
      %v878 = vshrl.u32 %v877, 7
      %v879 = vsub.s32 0, %v878
      %v880 = vrot.slane %v876, %v879
      %881 = vset.pattern.permute.xlu0 0
      %882 = vperm.xlu0 %881, %v823
      %v883 = vpop.permute.xlu0 %882
      %v884 = vlaneseq
      %v885 = vshrl.u32 %v884, 7
      %v886 = vsub.s32 0, %v885
      %v887 = vrot.slane %v883, %v886
      %888 = vset.pattern.permute.xlu0 0
      %889 = vperm.xlu0 %888, %v824
      %v890 = vpop.permute.xlu0 %889
      %v891 = vlaneseq
      %v892 = vshrl.u32 %v891, 7
      %v893 = vsub.s32 0, %v892
      %v894 = vrot.slane %v890, %v893
      %895 = vset.pattern.permute.xlu0 0
      %896 = vperm.xlu0 %895, %v825
      %v897 = vpop.permute.xlu0 %896
      %v898 = vlaneseq
      %v899 = vshrl.u32 %v898, 7
      %v900 = vsub.s32 0, %v899
      %v901 = vrot.slane %v897, %v900
      %902 = vset.pattern.permute.xlu0 0
      %903 = vperm.xlu0 %902, %v826
      %v904 = vpop.permute.xlu0 %903
      %v905 = vlaneseq
      %v906 = vshrl.u32 %v905, 7
      %v907 = vsub.s32 0, %v906
      %v908 = vrot.slane %v904, %v907
      %909 = vset.pattern.permute.xlu0 0
      %910 = vperm.xlu0 %909, %v827
      %v911 = vpop.permute.xlu0 %910
      %v912 = vlaneseq
      %v913 = vshrl.u32 %v912, 7
      %v914 = vsub.s32 0, %v913
      %v915 = vrot.slane %v911, %v914
      %916 = vset.pattern.permute.xlu0 0
      %917 = vperm.xlu0 %916, %v828
      %v918 = vpop.permute.xlu0 %917
      %v919 = vlaneseq
      %v920 = vshrl.u32 %v919, 7
      %v921 = vsub.s32 0, %v920
      %v922 = vrot.slane %v918, %v921
      %923 = vset.pattern.permute.xlu0 0
      %924 = vperm.xlu0 %923, %v829
      %v925 = vpop.permute.xlu0 %924
      %v926 = vlaneseq
      %v927 = vshrl.u32 %v926, 7
      %v928 = vsub.s32 0, %v927
      %v929 = vrot.slane %v925, %v928
      %930 = vset.pattern.permute.xlu0 0
      %931 = vperm.xlu0 %930, %v830
      %v932 = vpop.permute.xlu0 %931
      %v933 = vlaneseq
      %v934 = vshrl.u32 %v933, 7
      %v935 = vsub.s32 0, %v934
      %v936 = vrot.slane %v932, %v935
      %937 = vset.pattern.permute.xlu0 0
      %938 = vperm.xlu0 %937, %v831
      %v939 = vpop.permute.xlu0 %938
      %v940 = vlaneseq
      %v941 = vshrl.u32 %v940, 7
      %v942 = vsub.s32 0, %v941
      %v943 = vrot.slane %v939, %v942
      %vm944 = vcmp.eq.s32.totalorder %v838, 1
      %vm945 = vcmp.eq.s32.totalorder %v845, 1
      %vm946 = vcmp.eq.s32.totalorder %v852, 1
      %vm947 = vcmp.eq.s32.totalorder %v859, 1
      %vm948 = vcmp.eq.s32.totalorder %v866, 1
      %vm949 = vcmp.eq.s32.totalorder %v873, 1
      %vm950 = vcmp.eq.s32.totalorder %v880, 1
      %vm951 = vcmp.eq.s32.totalorder %v887, 1
      %vm952 = vcmp.eq.s32.totalorder %v894, 1
      %vm953 = vcmp.eq.s32.totalorder %v901, 1
      %vm954 = vcmp.eq.s32.totalorder %v908, 1
      %vm955 = vcmp.eq.s32.totalorder %v915, 1
      %vm956 = vcmp.eq.s32.totalorder %v922, 1
      %vm957 = vcmp.eq.s32.totalorder %v929, 1
      %vm958 = vcmp.eq.s32.totalorder %v936, 1
      %vm959 = vcmp.eq.s32.totalorder %v943, 1
      %v960 = vsel %vm944, %v667, %v815
      %v961 = vsel %vm945, %v668, %v815
      %v962 = vsel %vm946, %v669, %v815
      %v963 = vsel %vm947, %v670, %v815
      %v964 = vsel %vm948, %v671, %v815
      %v965 = vsel %vm949, %v672, %v815
      %v966 = vsel %vm950, %v673, %v815
      %v967 = vsel %vm951, %v674, %v815
      %v968 = vsel %vm952, %v675, %v815
      %v969 = vsel %vm953, %v676, %v815
      %v970 = vsel %vm954, %v677, %v815
      %v971 = vsel %vm955, %v678, %v815
      %v972 = vsel %vm956, %v679, %v815
      %v973 = vsel %vm957, %v680, %v815
      %v974 = vsel %vm958, %v681, %v815
      %v975 = vsel %vm959, %v682, %v815
      %v992 = vrot.slane %v961, 7
      %vm993 = vcmask 1041409
      %v994 = vsel %vm993, %v992, %v960
      %v995 = vrot.slane %v962, 6
      %vm996 = vcmask 1042434
      %v997 = vsel %vm996, %v995, %v994
      %v998 = vrot.slane %v963, 5
      %vm999 = vcmask 1043459
      %v1000 = vsel %vm999, %v998, %v997
      %v1001 = vrot.slane %v964, 4
      %vm1002 = vcmask 1044484
      %v1003 = vsel %vm1002, %v1001, %v1000
      %v1004 = vrot.slane %v965, 3
      %vm1005 = vcmask 1045509
      %v1006 = vsel %vm1005, %v1004, %v1003
      %v1007 = vrot.slane %v966, 2
      %vm1008 = vcmask 1046534
      %v1009 = vsel %vm1008, %v1007, %v1006
      %v1010 = vrot.slane %v967, 1
      %vm1011 = vcmask 1047559
      %v1012 = vsel %vm1011, %v1010, %v1009
      %v1013 = vrot.slane %v969, 7
      %v1014 = vsel %vm993, %v1013, %v968
      %v1015 = vrot.slane %v970, 6
      %v1016 = vsel %vm996, %v1015, %v1014
      %v1017 = vrot.slane %v971, 5
      %v1018 = vsel %vm999, %v1017, %v1016
      %v1019 = vrot.slane %v972, 4
      %v1020 = vsel %vm1002, %v1019, %v1018
      %v1021 = vrot.slane %v973, 3
      %v1022 = vsel %vm1005, %v1021, %v1020
      %v1023 = vrot.slane %v974, 2
      %v1024 = vsel %vm1008, %v1023, %v1022
      %v1025 = vrot.slane %v975, 1
      %v1026 = vsel %vm1011, %v1025, %v1024
      %1027 = vrot.lane.b32.xlu0 %v1012, 96
      %v1028 = vpop.permute.xlu0 %1027
      %1029 = vrot.lane.b32.xlu0 %v1026, 96
      %v1030 = vpop.permute.xlu0 %1029
      %vm1033 = vcmask 1048320
      %1034 = vst.msk [vmem:[#allocation2] sm:$0xff] %vm1033, %v1028
      %1035 = vst.msk [vmem:[#allocation2 + $0x8] sm:$0xff] %vm1033, %v1030
      %v1036 = vld [vmem:[#allocation2] sm:$0xff]
      %v1037 = vld [vmem:[#allocation2 + $0x8] sm:$0xff]
      %v1038 = vld [vmem:[%s4] sm:$0xff]
      %v1039 = vld [vmem:[%s4 + $0x8] sm:$0xff]
      %v1040 = vld [vmem:[%s4 + $0x10] sm:$0xff]
      %v1041 = vld [vmem:[%s4 + $0x18] sm:$0xff]
      %v1042 = vld [vmem:[%s4 + $0x20] sm:$0xff]
      %v1043 = vld [vmem:[%s4 + $0x28] sm:$0xff]
      %v1044 = vld [vmem:[%s4 + $0x30] sm:$0xff]
      %v1045 = vld [vmem:[%s4 + $0x38] sm:$0xff]
      %v1046 = vld [vmem:[%s4 + $0x40] sm:$0xff]
      %v1047 = vld [vmem:[%s4 + $0x48] sm:$0xff]
      %v1048 = vld [vmem:[%s4 + $0x50] sm:$0xff]
      %v1049 = vld [vmem:[%s4 + $0x58] sm:$0xff]
      %v1050 = vld [vmem:[%s4 + $0x60] sm:$0xff]
      %v1051 = vld [vmem:[%s4 + $0x68] sm:$0xff]
      %v1052 = vld [vmem:[%s4 + $0x70] sm:$0xff]
      %v1053 = vld [vmem:[%s4 + $0x78] sm:$0xff]
      %v1054 = vld [vmem:[%s5] sm:$0x1]
      %v1056 = vlaneseq
      %v1057 = vshrl.u32 %v1056, 7
      %v1058 = vsub.s32 0, %v1057
      %v1059 = vrot.slane %v1054, %v1058
      %1061 = vmatprep.subr.mxu0 0.0
      %1062 = vmatpush1.msra.mxu0 %v1038
      %1063 = vmatprep.subr.mxu0 0.0
      %1064 = vmatpush1.msra.mxu0 %v1039
      %1065 = vmatprep.subr.mxu0 0.0
      %1066 = vmatpush1.msra.mxu0 %v1040
      %1067 = vmatprep.subr.mxu0 0.0
      %1068 = vmatpush1.msra.mxu0 %v1041
      %1069 = vmatprep.subr.mxu0 0.0
      %1070 = vmatpush1.msra.mxu0 %v1042
      %1071 = vmatprep.subr.mxu0 0.0
      %1072 = vmatpush1.msra.mxu0 %v1043
      %1073 = vmatprep.subr.mxu0 0.0
      %1074 = vmatpush1.msra.mxu0 %v1044
      %1075 = vmatprep.subr.mxu0 0.0
      %1076 = vmatpush1.msra.mxu0 %v1045
      %1077 = vmatprep.subr.mxu0 0.0
      %1078 = vmatpush1.msra.mxu0 %v1046
      %1079 = vmatprep.subr.mxu0 0.0
      %1080 = vmatpush1.msra.mxu0 %v1047
      %1081 = vmatprep.subr.mxu0 0.0
      %1082 = vmatpush1.msra.mxu0 %v1048
      %1083 = vmatprep.subr.mxu0 0.0
      %1084 = vmatpush1.msra.mxu0 %v1049
      %1085 = vmatprep.subr.mxu0 0.0
      %1086 = vmatpush1.msra.mxu0 %v1050
      %1087 = vmatprep.subr.mxu0 0.0
      %1088 = vmatpush1.msra.mxu0 %v1051
      %1089 = vmatprep.subr.mxu0 0.0
      %1090 = vmatpush1.msra.mxu0 %v1052
      %1091 = vmatprep.subr.mxu0 0.0
      %1092 = vmatpush1.msra.mxu0 %v1053
      %1093 = vmatprep.subr.mxu0 0.0
      %1094 = vmatpush1.msra.mxu0 0.0
      %1095 = vmatprep.subr.mxu0 0.0
      %1096 = vmatpush1.msra.mxu0 0.0
      %1097 = vmatprep.subr.mxu0 0.0
      %1098 = vmatpush1.msra.mxu0 0.0
      %1099 = vmatprep.subr.mxu0 0.0
      %1100 = vmatpush1.msra.mxu0 0.0
      %1101 = vmatprep.subr.mxu0 0.0
      %1102 = vmatpush1.msra.mxu0 0.0
      %1103 = vmatprep.subr.mxu0 0.0
      %1104 = vmatpush1.msra.mxu0 0.0
      %1105 = vmatprep.subr.mxu0 0.0
      %1106 = vmatpush1.msra.mxu0 0.0
      %1107 = vmatprep.subr.mxu0 0.0
      %1108 = vmatpush1.msra.mxu0 0.0
      %1109 = vmatprep.subr.mxu0 0.0
      %1110 = vmatpush1.msra.mxu0 0.0
      %1111 = vmatprep.subr.mxu0 0.0
      %1112 = vmatpush1.msra.mxu0 0.0
      %1113 = vmatprep.subr.mxu0 0.0
      %1114 = vmatpush1.msra.mxu0 0.0
      %1115 = vmatprep.subr.mxu0 0.0
      %1116 = vmatpush1.msra.mxu0 0.0
      %1117 = vmatprep.subr.mxu0 0.0
      %1118 = vmatpush1.msra.mxu0 0.0
      %1119 = vmatprep.subr.mxu0 0.0
      %1120 = vmatpush1.msra.mxu0 0.0
      %1121 = vmatprep.subr.mxu0 0.0
      %1122 = vmatpush1.msra.mxu0 0.0
      %1123 = vmatprep.subr.mxu0 0.0
      %1124 = vmatpush1.msra.mxu0 0.0
      %1125 = vmatprep.mubr.f32.mxu0 0.0
      %1126 = vmatmul.mubr.f32.gmra.mrb[0].mxu0 %v1036
      %v1127 = vpop.f32.mrb[0].mxu0
      %v1128 = vadd.f32 %v1059, %v1127
      %v1129 = vpop.f32.mrb[0].mxu0
      %1130 = vmatprep.mubr.f32.mxu0 0.0
      %1131 = vmatmul.mubr.f32.gmra.mrb[0].mxu0 %v1037
      %v1132 = vpop.f32.mrb[0].mxu0
      %v1133 = vadd.f32 %v1059, %v1132
      %v1134 = vpop.f32.mrb[0].mxu0
      %1135 = vdwg.mxu0
      %vm1136 = vcmask 261120
      %1137 = vst.msk [vmem:[%s297] sm:$0xff] %vm1136, %v1128
      %1138 = vst.msk [vmem:[%s297 + $0x8] sm:$0xff] %vm1136, %v1133
      %s1139 = smul.u32 2, %s17
      %p1140 = scmp.lt.s32.totalorder %s1139, 7
      %s1141 = scalar_select %p1140, %s1139, 7
      %s1142 = smul.addr %s1141, 8
      %s1143 = scalar_lea.vmem %s6, %s1142
      // Predicated region
      $region45: #{tpu_custom_call.1} parent=43 // pred_check
        %p1144 = pneg %p176
      $region46: #{tpu_custom_call.1} parent=43 // pred_check_branch
        %1146 = sbr.rel (%p1144) target = $region48
      $region47: #{tpu_custom_call.1} parent=43 // pred_region
        %s1147 = smul.u32 2, %s17
      $region48: #{tpu_custom_call.1} parent=43 // pred_fallthru
        _
    $region44: #{tpu_custom_call.1} parent=5 // pred_fallthru
      _
    %p1148 = scmp.le.s32.totalorder 2, %s12
    // Predicated region
    $region49: #{tpu_custom_call.1} parent=5 // pred_check
      %p1149 = pneg %p1148
    $region50: #{tpu_custom_call.1} parent=5 // pred_check_branch
      %1151 = sbr.rel (%p1149) target = $region52
    $region51: #{tpu_custom_call.1} parent=5 // pred_region
      %s1152 = ssub.s32 %s12, 2
      // Predicated region
      $region53: #{tpu_custom_call.1} parent=51 // pred_check
        %p1153 = pneg %p182
      $region54: #{tpu_custom_call.1} parent=51 // pred_check_branch
        %1155 = sbr.rel (%p1153) target = $region56
      $region55: #{tpu_custom_call.1} parent=51 // pred_region
        %s1156 = smul.u32 2, %s18
        %p1157 = scmp.lt.s32.totalorder %s1156, 7
        %s1158 = scalar_select %p1157, %s1156, 7
        %s1159 = smul.addr %s1158, 8
        %s1160 = scalar_lea.vmem %s6, %s1159
      $region56: #{tpu_custom_call.1} parent=51 // pred_fallthru
        _
    $region52: #{tpu_custom_call.1} parent=5 // pred_fallthru
      _
  $region6: #{tpu_custom_call.1} parent=0 // loop_footer
    %s16 = sadd.s32 1, %s12
  $region7: #{tpu_custom_call.1} parent=0 // loop_footer_branch
    %11 = sbr.rel target = $region3
  $region8: #{tpu_custom_call.1} parent=0 // loop_exit
    _

</llo_original>
